<compile_context>
chip_gen: v5e
topology: v5e:2x2
jax: 0.10.0
libtpu: 0.0.40
codegen_flags: <defaults>
</compile_context>

<pallas_src>
import jax
import jax.numpy as jnp
import numpy as np
from jax.experimental import pallas as pl
from jax.experimental.pallas import tpu as pltpu


def _make_kernel(B, Cin, Cout, K, pad, L1, L2, Lpool):
    eps = 1e-5

    def kernel(xp_ref, w1_ref, g1_ref, be1_ref,
               w2_ref, g2_ref, be2_ref,
               w3_ref, b3_ref, out_ref):
        xp = xp_ref[...]                                   # (B, Lp, Cin), f32

        def conv(x3d, w_ref, Lout):
            # im2col: K shifted slices concatenated along channels -> one matmul.
            C = x3d.shape[2]
            cols = [x3d[:, k:k + Lout, :] for k in range(K)]   # K static slices
            X = jnp.concatenate(cols, axis=-1).reshape(B * Lout, K * C)
            return jnp.dot(X, w_ref[...], preferred_element_type=jnp.float32)

        def batchnorm(y2d, g_ref, be_ref):
            # Training-mode BN fused to per-channel scale/shift, single stats sweep.
            m = jnp.mean(y2d, axis=0, keepdims=True)           # (1, D)
            msq = jnp.mean(y2d * y2d, axis=0, keepdims=True)   # (1, D)
            scale = g_ref[...] * jax.lax.rsqrt(msq - m * m + eps)
            shift = be_ref[...] - m * scale
            return y2d * scale + shift                         # one FMA / element

        # ---- main branch: conv1 -> bn1 -> relu (conv1 bias absorbed by bn1) ----
        h1 = jnp.maximum(batchnorm(conv(xp, w1_ref, L1), g1_ref, be1_ref), 0.0)
        h1 = h1.reshape(B, L1, Cout)

        # in-value zero pad along L for conv2 (no scratch round-trip)
        if pad > 0:
            z = jnp.zeros((B, pad, Cout), jnp.float32)
            hp = jnp.concatenate([z, h1, z], axis=1)
        else:
            hp = h1

        # ---- main branch: conv2 -> bn2 (conv2 bias absorbed by bn2) ----
        y2 = batchnorm(conv(hp, w2_ref, L2), g2_ref, be2_ref).reshape(B, L2, Cout)

        # ---- downscale branch: conv3 + bias ----
        y3 = (conv(xp, w3_ref, L1) + b3_ref[...]).reshape(B, L1, Cout)

        # ---- MaxPool1d(2) on live values, add branches, final ReLU ----
        main_p = jnp.max(y2[:, :2 * Lpool, :].reshape(B, Lpool, 2, Cout), axis=2)
        ds_p = jnp.max(y3[:, :2 * Lpool, :].reshape(B, Lpool, 2, Cout), axis=2)
        out_ref[...] = jnp.maximum(main_p + ds_p, 0.0).astype(out_ref.dtype)

    return kernel


def residual_conv1d(x, params, kernel_size, padding):
    """x: (B, Cin, L) PyTorch NCL layout. Returns (B, Cout, L//2)."""
    w1, b1, g1, be1, w2, b2, g2, be2, w3, b3 = params
    del b1, b2  # exactly cancelled by the training-mode BatchNorm mean subtraction
    B, Cin, L = x.shape
    K, p = kernel_size, padding
    Cout = w1.shape[0]
    L1 = L + 2 * p - K + 1          # conv1 / downscale conv output length
    L2 = L1 + 2 * p - K + 1         # conv2 output length
    assert L1 // 2 == L2 // 2, "branch lengths must match after MaxPool1d(2)"
    Lpool = L2 // 2

    f32 = jnp.float32
    # channels-last activations; pre-pad x along L once in the wrapper
    x_blc = jnp.transpose(x, (0, 2, 1)).astype(f32)
    xp = jnp.pad(x_blc, ((0, 0), (p, p), (0, 0)))
    # PyTorch (Cout, Cin, K) -> im2col weight (K*Cin, Cout); column order k-major.
    w1k = jnp.transpose(w1, (2, 1, 0)).reshape(K * Cin, Cout).astype(f32)
    w2k = jnp.transpose(w2, (2, 1, 0)).reshape(K * Cout, Cout).astype(f32)
    w3k = jnp.transpose(w3, (2, 1, 0)).reshape(K * Cin, Cout).astype(f32)
    g1r, be1r, g2r, be2r, b3r = (
        v.reshape(1, Cout).astype(f32) for v in (g1, be1, g2, be2, b3))

    inputs = (xp, w1k, g1r, be1r, w2k, g2r, be2r, w3k, b3r)
    kernel = _make_kernel(B, Cin, Cout, K, p, L1, L2, Lpool)

    flops = int(2 * B * (L1 * K * Cin * Cout + L2 * K * Cout * Cout
                         + L1 * K * Cin * Cout)
                + 12 * B * (L1 + L2) * Cout)
    bytes_accessed = int(4 * (xp.size + w1k.size + w2k.size + w3k.size
                              + 5 * Cout + B * Lpool * Cout))

    out = pl.pallas_call(
        kernel,
        out_shape=jax.ShapeDtypeStruct((B, Lpool, Cout), jnp.float32),
        grid=(1,),
        in_specs=[pl.BlockSpec(a.shape, lambda i, n=a.ndim: (0,) * n)
                  for a in inputs],
        out_specs=pl.BlockSpec((B, Lpool, Cout), lambda i: (0, 0, 0)),
        compiler_params=pltpu.CompilerParams(dimension_semantics=("arbitrary",)),
        cost_estimate=pl.CostEstimate(flops=flops,
                                      transcendentals=2 * Cout,
                                      bytes_accessed=bytes_accessed),
    )(*inputs)

    return jnp.transpose(out, (0, 2, 1))   # back to PyTorch (B, Cout, Lpool)


def reference(x, params, K, p):
    """Pure-JAX reference mirroring PyTorch semantics (NCL layout)."""
    w1, b1, g1, be1, w2, b2, g2, be2, w3, b3 = params

    def conv(x, w, b):
        y = jax.lax.conv_general_dilated(
            x, w, window_strides=(1,), padding=[(p, p)],
            dimension_numbers=("NCH", "OIH", "NCH"))
        return y + b[None, :, None]

    def bn(y, g, be, eps=1e-5):
        m = jnp.mean(y, axis=(0, 2), keepdims=True)
        v = jnp.mean((y - m) ** 2, axis=(0, 2), keepdims=True)
        return (y - m) / jnp.sqrt(v + eps) * g[None, :, None] + be[None, :, None]

    def pool(y):
        B, C, L = y.shape
        return jnp.max(y[:, :, :(L // 2) * 2].reshape(B, C, L // 2, 2), axis=-1)

    main = pool(bn(conv(jnp.maximum(bn(conv(x, w1, b1), g1, be1), 0.0), w2, b2),
                   g2, be2))
    ds = pool(conv(x, w3, b3))
    return jnp.maximum(main + ds, 0.0)


if __name__ == "__main__":
    B, Cin, Cout, K, P, L = 2, 4, 8, 3, 1, 16

    key = jax.random.PRNGKey(0)
    ks = jax.random.split(key, 11)
    w1 = 0.2 * jax.random.normal(ks[0], (Cout, Cin, K), jnp.float32)
    b1 = 0.1 * jax.random.normal(ks[1], (Cout,), jnp.float32)
    g1 = 1.0 + 0.1 * jax.random.normal(ks[2], (Cout,), jnp.float32)
    be1 = 0.1 * jax.random.normal(ks[3], (Cout,), jnp.float32)
    w2 = 0.2 * jax.random.normal(ks[4], (Cout, Cout, K), jnp.float32)
    b2 = 0.1 * jax.random.normal(ks[5], (Cout,), jnp.float32)
    g2 = 1.0 + 0.1 * jax.random.normal(ks[6], (Cout,), jnp.float32)
    be2 = 0.1 * jax.random.normal(ks[7], (Cout,), jnp.float32)
    w3 = 0.2 * jax.random.normal(ks[8], (Cout, Cin, K), jnp.float32)
    b3 = 0.1 * jax.random.normal(ks[9], (Cout,), jnp.float32)
    x = jax.random.normal(ks[10], (B, Cin, L), jnp.float32)
    params = (w1, b1, g1, be1, w2, b2, g2, be2, w3, b3)

    out = jax.block_until_ready(residual_conv1d(x, params, K, P))
    ref = jax.block_until_ready(reference(x, params, K, P))
    assert out.shape == ref.shape == (B, Cout, L // 2)
    np.testing.assert_allclose(np.asarray(out), np.asarray(ref), rtol=2e-3, atol=2e-3)
    print("KERNEL_OK")
</pallas_src>

<mosaic_0001>
module attributes {stable_mosaic.version = 11 : i64} {
  func.func @kernel(%arg0: i32, %arg1: memref<2x18x4xf32, #tpu.memory_space<vmem>>, %arg2: memref<12x8xf32, #tpu.memory_space<vmem>>, %arg3: memref<1x8xf32, #tpu.memory_space<vmem>>, %arg4: memref<1x8xf32, #tpu.memory_space<vmem>>, %arg5: memref<24x8xf32, #tpu.memory_space<vmem>>, %arg6: memref<1x8xf32, #tpu.memory_space<vmem>>, %arg7: memref<1x8xf32, #tpu.memory_space<vmem>>, %arg8: memref<12x8xf32, #tpu.memory_space<vmem>>, %arg9: memref<1x8xf32, #tpu.memory_space<vmem>>, %arg10: memref<2x8x8xf32, #tpu.memory_space<vmem>>) attributes {dimension_semantics = [#tpu.dimension_semantics<arbitrary>], iteration_bounds = array<i64: 1>, scalar_prefetch = 0 : i64, scratch_operands = 0 : i64, tpu.core_type = #tpu.core_type<tc>, window_params = [{pipeline_mode = #tpu.pipeline_mode<synchronous>, transform_indices = @transform_0, window_bounds = array<i64: 2, 18, 4>}, {pipeline_mode = #tpu.pipeline_mode<synchronous>, transform_indices = @transform_1, window_bounds = array<i64: 12, 8>}, {pipeline_mode = #tpu.pipeline_mode<synchronous>, transform_indices = @transform_2, window_bounds = array<i64: 1, 8>}, {pipeline_mode = #tpu.pipeline_mode<synchronous>, transform_indices = @transform_3, window_bounds = array<i64: 1, 8>}, {pipeline_mode = #tpu.pipeline_mode<synchronous>, transform_indices = @transform_4, window_bounds = array<i64: 24, 8>}, {pipeline_mode = #tpu.pipeline_mode<synchronous>, transform_indices = @transform_5, window_bounds = array<i64: 1, 8>}, {pipeline_mode = #tpu.pipeline_mode<synchronous>, transform_indices = @transform_6, window_bounds = array<i64: 1, 8>}, {pipeline_mode = #tpu.pipeline_mode<synchronous>, transform_indices = @transform_7, window_bounds = array<i64: 12, 8>}, {pipeline_mode = #tpu.pipeline_mode<synchronous>, transform_indices = @transform_8, window_bounds = array<i64: 1, 8>}, {pipeline_mode = #tpu.pipeline_mode<synchronous>, transform_indices = @transform_9, window_bounds = array<i64: 2, 8, 8>}]} {
    %c0 = arith.constant 0 : index
    %c0_0 = arith.constant 0 : index
    %c0_1 = arith.constant 0 : index
    %0 = vector.load %arg1[%c0, %c0_0, %c0_1] : memref<2x18x4xf32, #tpu.memory_space<vmem>>, vector<2x18x4xf32>
    %1 = vector.extract_strided_slice %0 {offsets = [0, 0, 0], sizes = [2, 16, 4], strides = [1, 1, 1]} : vector<2x18x4xf32> to vector<2x16x4xf32>
    %2 = vector.extract_strided_slice %0 {offsets = [0, 1, 0], sizes = [2, 16, 4], strides = [1, 1, 1]} : vector<2x18x4xf32> to vector<2x16x4xf32>
    %3 = vector.extract_strided_slice %0 {offsets = [0, 2, 0], sizes = [2, 16, 4], strides = [1, 1, 1]} : vector<2x18x4xf32> to vector<2x16x4xf32>
    %4 = tpu.concatenate %1, %2, %3 in 2 : vector<2x16x4xf32>, vector<2x16x4xf32>, vector<2x16x4xf32> -> vector<2x16x12xf32>
    %5 = vector.shape_cast %4 : vector<2x16x12xf32> to vector<32x12xf32>
    %c0_2 = arith.constant 0 : index
    %c0_3 = arith.constant 0 : index
    %6 = vector.load %arg2[%c0_2, %c0_3] : memref<12x8xf32, #tpu.memory_space<vmem>>, vector<12x8xf32>
    %cst = arith.constant dense<0.000000e+00> : vector<32x8xf32>
    %7 = tpu.matmul %5, %6, %cst {dimension_numbers = #tpu.dot_dimension_numbers<[1], [0], [0], [1], [0, 0, 1, 1], [], []>} : vector<32x12xf32>, vector<12x8xf32>, vector<32x8xf32> -> vector<32x8xf32>
    %cst_4 = arith.constant dense<0.000000e+00> : vector<8xf32>
    %8 = vector.multi_reduction <add>, %7, %cst_4 [0] : vector<32x8xf32> to vector<8xf32>
    %9 = vector.shape_cast %8 : vector<8xf32> to vector<1x8xf32>
    %cst_5 = arith.constant 3.200000e+01 : f32
    %10 = vector.broadcast %cst_5 : f32 to vector<1x8xf32>
    %11 = arith.divf %9, %10 : vector<1x8xf32>
    %12 = arith.mulf %7, %7 : vector<32x8xf32>
    %cst_6 = arith.constant dense<0.000000e+00> : vector<8xf32>
    %13 = vector.multi_reduction <add>, %12, %cst_6 [0] : vector<32x8xf32> to vector<8xf32>
    %14 = vector.shape_cast %13 : vector<8xf32> to vector<1x8xf32>
    %cst_7 = arith.constant 3.200000e+01 : f32
    %15 = vector.broadcast %cst_7 : f32 to vector<1x8xf32>
    %16 = arith.divf %14, %15 : vector<1x8xf32>
    %c0_8 = arith.constant 0 : index
    %c0_9 = arith.constant 0 : index
    %17 = vector.load %arg3[%c0_8, %c0_9] : memref<1x8xf32, #tpu.memory_space<vmem>>, vector<1x8xf32>
    %18 = arith.mulf %11, %11 : vector<1x8xf32>
    %19 = arith.subf %16, %18 : vector<1x8xf32>
    %cst_10 = arith.constant 9.99999974E-6 : f32
    %20 = vector.broadcast %cst_10 : f32 to vector<1x8xf32>
    %21 = arith.addf %19, %20 : vector<1x8xf32>
    %22 = math.rsqrt %21 : vector<1x8xf32>
    %23 = arith.mulf %17, %22 : vector<1x8xf32>
    %c0_11 = arith.constant 0 : index
    %c0_12 = arith.constant 0 : index
    %24 = vector.load %arg4[%c0_11, %c0_12] : memref<1x8xf32, #tpu.memory_space<vmem>>, vector<1x8xf32>
    %25 = arith.mulf %11, %23 : vector<1x8xf32>
    %26 = arith.subf %24, %25 : vector<1x8xf32>
    %27 = vector.broadcast %23 : vector<1x8xf32> to vector<32x8xf32>
    %28 = arith.mulf %7, %27 : vector<32x8xf32>
    %29 = vector.broadcast %26 : vector<1x8xf32> to vector<32x8xf32>
    %30 = arith.addf %28, %29 : vector<32x8xf32>
    %cst_13 = arith.constant 0.000000e+00 : f32
    %31 = vector.broadcast %cst_13 : f32 to vector<32x8xf32>
    %32 = arith.maximumf %30, %31 : vector<32x8xf32>
    %33 = vector.shape_cast %32 : vector<32x8xf32> to vector<2x16x8xf32>
    %cst_14 = arith.constant 0.000000e+00 : f32
    %34 = vector.broadcast %cst_14 : f32 to vector<2x1x8xf32>
    %35 = tpu.concatenate %34, %33, %34 in 1 : vector<2x1x8xf32>, vector<2x16x8xf32>, vector<2x1x8xf32> -> vector<2x18x8xf32>
    %36 = vector.extract_strided_slice %35 {offsets = [0, 0, 0], sizes = [2, 16, 8], strides = [1, 1, 1]} : vector<2x18x8xf32> to vector<2x16x8xf32>
    %37 = vector.extract_strided_slice %35 {offsets = [0, 1, 0], sizes = [2, 16, 8], strides = [1, 1, 1]} : vector<2x18x8xf32> to vector<2x16x8xf32>
    %38 = vector.extract_strided_slice %35 {offsets = [0, 2, 0], sizes = [2, 16, 8], strides = [1, 1, 1]} : vector<2x18x8xf32> to vector<2x16x8xf32>
    %39 = tpu.concatenate %36, %37, %38 in 2 : vector<2x16x8xf32>, vector<2x16x8xf32>, vector<2x16x8xf32> -> vector<2x16x24xf32>
    %40 = vector.shape_cast %39 : vector<2x16x24xf32> to vector<32x24xf32>
    %c0_15 = arith.constant 0 : index
    %c0_16 = arith.constant 0 : index
    %41 = vector.load %arg5[%c0_15, %c0_16] : memref<24x8xf32, #tpu.memory_space<vmem>>, vector<24x8xf32>
    %cst_17 = arith.constant dense<0.000000e+00> : vector<32x8xf32>
    %42 = tpu.matmul %40, %41, %cst_17 {dimension_numbers = #tpu.dot_dimension_numbers<[1], [0], [0], [1], [0, 0, 1, 1], [], []>} : vector<32x24xf32>, vector<24x8xf32>, vector<32x8xf32> -> vector<32x8xf32>
    %cst_18 = arith.constant dense<0.000000e+00> : vector<8xf32>
    %43 = vector.multi_reduction <add>, %42, %cst_18 [0] : vector<32x8xf32> to vector<8xf32>
    %44 = vector.shape_cast %43 : vector<8xf32> to vector<1x8xf32>
    %cst_19 = arith.constant 3.200000e+01 : f32
    %45 = vector.broadcast %cst_19 : f32 to vector<1x8xf32>
    %46 = arith.divf %44, %45 : vector<1x8xf32>
    %47 = arith.mulf %42, %42 : vector<32x8xf32>
    %cst_20 = arith.constant dense<0.000000e+00> : vector<8xf32>
    %48 = vector.multi_reduction <add>, %47, %cst_20 [0] : vector<32x8xf32> to vector<8xf32>
    %49 = vector.shape_cast %48 : vector<8xf32> to vector<1x8xf32>
    %cst_21 = arith.constant 3.200000e+01 : f32
    %50 = vector.broadcast %cst_21 : f32 to vector<1x8xf32>
    %51 = arith.divf %49, %50 : vector<1x8xf32>
    %c0_22 = arith.constant 0 : index
    %c0_23 = arith.constant 0 : index
    %52 = vector.load %arg6[%c0_22, %c0_23] : memref<1x8xf32, #tpu.memory_space<vmem>>, vector<1x8xf32>
    %53 = arith.mulf %46, %46 : vector<1x8xf32>
    %54 = arith.subf %51, %53 : vector<1x8xf32>
    %cst_24 = arith.constant 9.99999974E-6 : f32
    %55 = vector.broadcast %cst_24 : f32 to vector<1x8xf32>
    %56 = arith.addf %54, %55 : vector<1x8xf32>
    %57 = math.rsqrt %56 : vector<1x8xf32>
    %58 = arith.mulf %52, %57 : vector<1x8xf32>
    %c0_25 = arith.constant 0 : index
    %c0_26 = arith.constant 0 : index
    %59 = vector.load %arg7[%c0_25, %c0_26] : memref<1x8xf32, #tpu.memory_space<vmem>>, vector<1x8xf32>
    %60 = arith.mulf %46, %58 : vector<1x8xf32>
    %61 = arith.subf %59, %60 : vector<1x8xf32>
    %62 = vector.broadcast %58 : vector<1x8xf32> to vector<32x8xf32>
    %63 = arith.mulf %42, %62 : vector<32x8xf32>
    %64 = vector.broadcast %61 : vector<1x8xf32> to vector<32x8xf32>
    %65 = arith.addf %63, %64 : vector<32x8xf32>
    %66 = vector.shape_cast %65 : vector<32x8xf32> to vector<2x16x8xf32>
    %67 = vector.extract_strided_slice %0 {offsets = [0, 0, 0], sizes = [2, 16, 4], strides = [1, 1, 1]} : vector<2x18x4xf32> to vector<2x16x4xf32>
    %68 = vector.extract_strided_slice %0 {offsets = [0, 1, 0], sizes = [2, 16, 4], strides = [1, 1, 1]} : vector<2x18x4xf32> to vector<2x16x4xf32>
    %69 = vector.extract_strided_slice %0 {offsets = [0, 2, 0], sizes = [2, 16, 4], strides = [1, 1, 1]} : vector<2x18x4xf32> to vector<2x16x4xf32>
    %70 = tpu.concatenate %67, %68, %69 in 2 : vector<2x16x4xf32>, vector<2x16x4xf32>, vector<2x16x4xf32> -> vector<2x16x12xf32>
    %71 = vector.shape_cast %70 : vector<2x16x12xf32> to vector<32x12xf32>
    %c0_27 = arith.constant 0 : index
    %c0_28 = arith.constant 0 : index
    %72 = vector.load %arg8[%c0_27, %c0_28] : memref<12x8xf32, #tpu.memory_space<vmem>>, vector<12x8xf32>
    %cst_29 = arith.constant dense<0.000000e+00> : vector<32x8xf32>
    %73 = tpu.matmul %71, %72, %cst_29 {dimension_numbers = #tpu.dot_dimension_numbers<[1], [0], [0], [1], [0, 0, 1, 1], [], []>} : vector<32x12xf32>, vector<12x8xf32>, vector<32x8xf32> -> vector<32x8xf32>
    %c0_30 = arith.constant 0 : index
    %c0_31 = arith.constant 0 : index
    %74 = vector.load %arg9[%c0_30, %c0_31] : memref<1x8xf32, #tpu.memory_space<vmem>>, vector<1x8xf32>
    %75 = vector.broadcast %74 : vector<1x8xf32> to vector<32x8xf32>
    %76 = arith.addf %73, %75 : vector<32x8xf32>
    %77 = vector.shape_cast %76 : vector<32x8xf32> to vector<2x16x8xf32>
    %78 = vector.shape_cast %66 : vector<2x16x8xf32> to vector<2x8x2x8xf32>
    %cst_32 = arith.constant dense<0xFF800000> : vector<2x8x8xf32>
    %79 = vector.multi_reduction <maximumf>, %78, %cst_32 [2] : vector<2x8x2x8xf32> to vector<2x8x8xf32>
    %80 = vector.shape_cast %77 : vector<2x16x8xf32> to vector<2x8x2x8xf32>
    %cst_33 = arith.constant dense<0xFF800000> : vector<2x8x8xf32>
    %81 = vector.multi_reduction <maximumf>, %80, %cst_33 [2] : vector<2x8x2x8xf32> to vector<2x8x8xf32>
    %82 = arith.addf %79, %81 : vector<2x8x8xf32>
    %cst_34 = arith.constant 0.000000e+00 : f32
    %83 = vector.broadcast %cst_34 : f32 to vector<2x8x8xf32>
    %84 = arith.maximumf %82, %83 : vector<2x8x8xf32>
    %c0_35 = arith.constant 0 : index
    %c0_36 = arith.constant 0 : index
    %c0_37 = arith.constant 0 : index
    %85 = vector.load %arg10[%c0_35, %c0_36, %c0_37] : memref<2x8x8xf32, #tpu.memory_space<vmem>>, vector<2x8x8xf32>
    tpu.vector_store %arg10[%c0_35, %c0_36, %c0_37], %84 {strides = array<i32>} : memref<2x8x8xf32, #tpu.memory_space<vmem>>, vector<2x8x8xf32>,
    return
  }
  func.func @transform_0(%arg0: i32) -> (i32, i32, i32) {
    %c0_i32 = arith.constant 0 : i32
    %c0_i32_0 = arith.constant 0 : i32
    %c0_i32_1 = arith.constant 0 : i32
    %c0_i32_2 = arith.constant 0 : i32
    return %c0_i32, %c0_i32_0, %c0_i32_1 : i32, i32, i32
  }
  func.func @transform_1(%arg0: i32) -> (i32, i32) {
    %c0_i32 = arith.constant 0 : i32
    %c0_i32_0 = arith.constant 0 : i32
    %c0_i32_1 = arith.constant 0 : i32
    return %c0_i32, %c0_i32_0 : i32, i32
  }
  func.func @transform_2(%arg0: i32) -> (i32, i32) {
    %c0_i32 = arith.constant 0 : i32
    %c0_i32_0 = arith.constant 0 : i32
    %c0_i32_1 = arith.constant 0 : i32
    return %c0_i32, %c0_i32_0 : i32, i32
  }
  func.func @transform_3(%arg0: i32) -> (i32, i32) {
    %c0_i32 = arith.constant 0 : i32
    %c0_i32_0 = arith.constant 0 : i32
    %c0_i32_1 = arith.constant 0 : i32
    return %c0_i32, %c0_i32_0 : i32, i32
  }
  func.func @transform_4(%arg0: i32) -> (i32, i32) {
    %c0_i32 = arith.constant 0 : i32
    %c0_i32_0 = arith.constant 0 : i32
    %c0_i32_1 = arith.constant 0 : i32
    return %c0_i32, %c0_i32_0 : i32, i32
  }
  func.func @transform_5(%arg0: i32) -> (i32, i32) {
    %c0_i32 = arith.constant 0 : i32
    %c0_i32_0 = arith.constant 0 : i32
    %c0_i32_1 = arith.constant 0 : i32
    return %c0_i32, %c0_i32_0 : i32, i32
  }
  func.func @transform_6(%arg0: i32) -> (i32, i32) {
    %c0_i32 = arith.constant 0 : i32
    %c0_i32_0 = arith.constant 0 : i32
    %c0_i32_1 = arith.constant 0 : i32
    return %c0_i32, %c0_i32_0 : i32, i32
  }
  func.func @transform_7(%arg0: i32) -> (i32, i32) {
    %c0_i32 = arith.constant 0 : i32
    %c0_i32_0 = arith.constant 0 : i32
    %c0_i32_1 = arith.constant 0 : i32
    return %c0_i32, %c0_i32_0 : i32, i32
  }
  func.func @transform_8(%arg0: i32) -> (i32, i32) {
    %c0_i32 = arith.constant 0 : i32
    %c0_i32_0 = arith.constant 0 : i32
    %c0_i32_1 = arith.constant 0 : i32
    return %c0_i32, %c0_i32_0 : i32, i32
  }
  func.func @transform_9(%arg0: i32) -> (i32, i32, i32) {
    %c0_i32 = arith.constant 0 : i32
    %c0_i32_0 = arith.constant 0 : i32
    %c0_i32_1 = arith.constant 0 : i32
    %c0_i32_2 = arith.constant 0 : i32
    return %c0_i32, %c0_i32_0, %c0_i32_1 : i32, i32, i32
  }
}

</mosaic_0001>

<llo_original>
// kernel: tpu_custom_call.1
$region0: #{tpu_custom_call.1}
  #allocation0 [shape = 'u32[]', space=smem, size = 0x4, offset = 0x4, fixed_abs, tag = 'smem constant byte address 0x4 - core index']
  #allocation1 [shape = 'u32[72,128]{1,0:T(1,128)}', space=vmem, size = 0x9000, scoped, tag = 'internal scratch']
  %s0 = inlined_call_operand.vmem [shape: f32[2,18,4], index: 0, kind: input, shape index: {}]
  %s1 = inlined_call_operand.vmem [shape: f32[12,8], index: 1, kind: input, shape index: {}]
  %s2 = inlined_call_operand.vmem [shape: f32[1,8], index: 2, kind: input, shape index: {}]
  %s3 = inlined_call_operand.vmem [shape: f32[1,8], index: 3, kind: input, shape index: {}]
  %s4 = inlined_call_operand.vmem [shape: f32[24,8], index: 4, kind: input, shape index: {}]
  %s5 = inlined_call_operand.vmem [shape: f32[1,8], index: 5, kind: input, shape index: {}]
  %s6 = inlined_call_operand.vmem [shape: f32[1,8], index: 6, kind: input, shape index: {}]
  %s7 = inlined_call_operand.vmem [shape: f32[12,8], index: 7, kind: input, shape index: {}]
  %s8 = inlined_call_operand.vmem [shape: f32[1,8], index: 8, kind: input, shape index: {}]
  %s9 = inlined_call_operand.hbm [shape: f32[2,8,8], index: 9, kind: output, shape index: {}]
  %s10 = sld [smem:[#allocation0]]
  $region46: #{tpu_custom_call.1} parent=0
    _
  %s12 = ssub.s32 1, %s10
  %s13 = scalar_select 0, %s12, %s10
  $region1: #{tpu_custom_call.1} parent=0
    #allocation2 [shape = 'u8[8192]{0}', space=vmem, size = 0x2000, scoped, tag = 'output window, operand 0, single buffered']
    #allocation3 [shape = 's32[1]{0}', space=sflag, size = 0x4, scoped, tag = 'scoped memory for tpu_custom_call.1']
    %14 = vsyncpa [#allocation3], 0
    // Predicated region
    $region2: #{tpu_custom_call.1} parent=1 // pred_check
      _
    $region3: #{tpu_custom_call.1} parent=1 // pred_check_branch
      %16 = sbr.rel (0) target = $region5
    $region4: #{tpu_custom_call.1} parent=1 // pred_region
      _
    $region5: #{tpu_custom_call.1} parent=1 // pred_fallthru
      _
    // Predicated region
    $region6: #{tpu_custom_call.1} parent=1 // pred_check
      _
    $region7: #{tpu_custom_call.1} parent=1 // pred_check_branch
      %18 = sbr.rel (0) target = $region9
    $region8: #{tpu_custom_call.1} parent=1 // pred_region
      _
    $region9: #{tpu_custom_call.1} parent=1 // pred_fallthru
      _
    // Predicated region
    $region10: #{tpu_custom_call.1} parent=1 // pred_check
      _
    $region11: #{tpu_custom_call.1} parent=1 // pred_check_branch
      %20 = sbr.rel (0) target = $region13
    $region12: #{tpu_custom_call.1} parent=1 // pred_region
      _
    $region13: #{tpu_custom_call.1} parent=1 // pred_fallthru
      _
    // Predicated region
    $region14: #{tpu_custom_call.1} parent=1 // pred_check
      _
    $region15: #{tpu_custom_call.1} parent=1 // pred_check_branch
      %22 = sbr.rel (0) target = $region17
    $region16: #{tpu_custom_call.1} parent=1 // pred_region
      _
    $region17: #{tpu_custom_call.1} parent=1 // pred_fallthru
      _
    // Predicated region
    $region18: #{tpu_custom_call.1} parent=1 // pred_check
      _
    $region19: #{tpu_custom_call.1} parent=1 // pred_check_branch
      %24 = sbr.rel (0) target = $region21
    $region20: #{tpu_custom_call.1} parent=1 // pred_region
      _
    $region21: #{tpu_custom_call.1} parent=1 // pred_fallthru
      _
    // Predicated region
    $region22: #{tpu_custom_call.1} parent=1 // pred_check
      _
    $region23: #{tpu_custom_call.1} parent=1 // pred_check_branch
      %26 = sbr.rel (0) target = $region25
    $region24: #{tpu_custom_call.1} parent=1 // pred_region
      _
    $region25: #{tpu_custom_call.1} parent=1 // pred_fallthru
      _
    // Predicated region
    $region26: #{tpu_custom_call.1} parent=1 // pred_check
      _
    $region27: #{tpu_custom_call.1} parent=1 // pred_check_branch
      %28 = sbr.rel (0) target = $region29
    $region28: #{tpu_custom_call.1} parent=1 // pred_region
      _
    $region29: #{tpu_custom_call.1} parent=1 // pred_fallthru
      _
    // Predicated region
    $region30: #{tpu_custom_call.1} parent=1 // pred_check
      _
    $region31: #{tpu_custom_call.1} parent=1 // pred_check_branch
      %30 = sbr.rel (0) target = $region33
    $region32: #{tpu_custom_call.1} parent=1 // pred_region
      _
    $region33: #{tpu_custom_call.1} parent=1 // pred_fallthru
      _
    // Predicated region
    $region34: #{tpu_custom_call.1} parent=1 // pred_check
      _
    $region35: #{tpu_custom_call.1} parent=1 // pred_check_branch
      %32 = sbr.rel (0) target = $region37
    $region36: #{tpu_custom_call.1} parent=1 // pred_region
      _
    $region37: #{tpu_custom_call.1} parent=1 // pred_fallthru
      _
    %v33 = vld [vmem:[%s0] sm:$0xff]
    %v34 = vld [vmem:[%s0 + $0x8] sm:$0xff]
    %v35 = vld [vmem:[%s0 + $0x10] sm:$0x3]
    %v36 = vld [vmem:[%s0 + $0x18] sm:$0xff]
    %v37 = vld [vmem:[%s0 + $0x20] sm:$0xff]
    %v38 = vld [vmem:[%s0 + $0x28] sm:$0x3]
    %vm45 = vcmask 1046528
    %v46 = vrot.slane %v33, 1
    %v47 = vrot.slane %v34, 1
    %v48 = vsel %vm45, %v46, %v47
    %v49 = vrot.slane %v35, 1
    %v50 = vsel %vm45, %v47, %v49
    %v51 = vrot.slane %v36, 1
    %v52 = vrot.slane %v37, 1
    %v53 = vsel %vm45, %v51, %v52
    %v54 = vrot.slane %v38, 1
    %v55 = vsel %vm45, %v52, %v54
    %56 = vrot.lane.b32.xlu0 %v48, 4
    %v57 = vpop.permute.xlu0 %56
    %58 = vrot.lane.b32.xlu0 %v50, 4
    %v59 = vpop.permute.xlu0 %58
    %60 = vrot.lane.b32.xlu0 %v53, 4
    %v61 = vpop.permute.xlu0 %60
    %62 = vrot.lane.b32.xlu0 %v55, 4
    %v63 = vpop.permute.xlu0 %62
    %vm68 = vcmask 1045504
    %v69 = vrot.slane %v33, 2
    %v70 = vrot.slane %v34, 2
    %v71 = vsel %vm68, %v69, %v70
    %v72 = vrot.slane %v35, 2
    %v73 = vsel %vm68, %v70, %v72
    %v74 = vrot.slane %v36, 2
    %v75 = vrot.slane %v37, 2
    %v76 = vsel %vm68, %v74, %v75
    %v77 = vrot.slane %v38, 2
    %v78 = vsel %vm68, %v75, %v77
    %79 = vrot.lane.b32.xlu0 %v71, 8
    %v80 = vpop.permute.xlu0 %79
    %81 = vrot.lane.b32.xlu0 %v73, 8
    %v82 = vpop.permute.xlu0 %81
    %83 = vrot.lane.b32.xlu0 %v76, 8
    %v84 = vpop.permute.xlu0 %83
    %85 = vrot.lane.b32.xlu0 %v78, 8
    %v86 = vpop.permute.xlu0 %85
    %vm91 = vcmask 31744
    %v92 = vsel %vm91, %v33, %v57
    %v93 = vsel %vm91, %v34, %v59
    %v94 = vsel %vm91, %v36, %v61
    %v95 = vsel %vm91, %v37, %v63
    %vm96 = vcmask 64512
    %v97 = vsel %vm96, %v92, %v80
    %v98 = vsel %vm96, %v93, %v82
    %v99 = vsel %vm96, %v94, %v84
    %v100 = vsel %vm96, %v95, %v86
    %v101 = vld [vmem:[%s1] sm:$0xff]
    %v102 = vld [vmem:[%s1 + $0x8] sm:$0xf]
    %vm103 = vcmask 97280
    %v105 = vsel %vm103, %v97, 0
    %v108 = vsel %vm103, %v98, 0
    %v111 = vsel %vm103, %v99, 0
    %v114 = vsel %vm103, %v100, 0
    %vm116 = vcmask 1043456
    %v118 = vsel %vm116, %v102, 0
    %120 = vmatpush.msra.mxu0 0.0
    %121 = vmatpush.msra.mxu0 0.0
    %122 = vmatpush.msra.mxu0 0.0
    %123 = vmatpush.msra.mxu0 0.0
    %124 = vmatpush.msra.mxu0 0.0
    %125 = vmatpush.msra.mxu0 0.0
    %126 = vmatpush.msra.mxu0 0.0
    %127 = vmatpush.msra.mxu0 0.0
    %128 = vmatpush.msra.mxu0 0.0
    %129 = vmatpush.msra.mxu0 0.0
    %130 = vmatpush.msra.mxu0 0.0
    %131 = vmatpush.msra.mxu0 0.0
    %132 = vmatpush.msra.mxu0 0.0
    %133 = vmatpush.msra.mxu0 0.0
    %134 = vmatpush.msra.mxu0 %v118
    %135 = vmatpush.msra.mxu0 %v101
    %136 = vmatmul.f32.gmra.mxu0 %v105
    %v137 = vpop.f32.mrf.mxu0
    %v138 = vadd.f32 0.0, %v137
    %139 = vmatmul.f32.gmra.mxu0 %v108
    %v140 = vpop.f32.mrf.mxu0
    %v141 = vadd.f32 0.0, %v140
    %142 = vmatmul.f32.gmra.mxu0 %v111
    %v143 = vpop.f32.mrf.mxu0
    %v144 = vadd.f32 0.0, %v143
    %145 = vmatmul.f32.gmra.mxu0 %v114
    %v146 = vpop.f32.mrf.mxu0
    %v147 = vadd.f32 0.0, %v146
    %148 = vdwg.mxu0
    %v149 = vsel %vm96, %v138, 0.0
    %v150 = vsel %vm96, %v141, 0.0
    %v151 = vadd.f32 %v149, %v150
    %v152 = vsel %vm96, %v144, 0.0
    %v153 = vadd.f32 %v151, %v152
    %v154 = vsel %vm96, %v147, 0.0
    %v155 = vadd.f32 %v153, %v154
    %v156 = vrot.slane %v155, 4
    %v157 = vadd.f32 %v155, %v156
    %v158 = vrot.slane %v157, 2
    %v159 = vadd.f32 %v157, %v158
    %v160 = vrot.slane %v159, 1
    %v161 = vadd.f32 %v159, %v160
    %v162 = vrcp.pop 32.0
    %v163 = vmul.f32 32.0, %v162
    %v164 = vsub.f32 1.0, %v163
    %v165 = vmul.f32 %v162, %v164
    %v166 = vadd.f32 %v162, %v165
    %vm167 = vweird.f32 %v162
    %v168 = vsel %vm167, %v162, %v166
    %v169 = vmul.f32 %v161, %v168
    %v170 = vmul.f32 %v138, %v138
    %v171 = vmul.f32 %v141, %v141
    %v172 = vmul.f32 %v144, %v144
    %v173 = vmul.f32 %v147, %v147
    %v174 = vsel %vm96, %v170, 0.0
    %v175 = vsel %vm96, %v171, 0.0
    %v176 = vadd.f32 %v174, %v175
    %v177 = vsel %vm96, %v172, 0.0
    %v178 = vadd.f32 %v176, %v177
    %v179 = vsel %vm96, %v173, 0.0
    %v180 = vadd.f32 %v178, %v179
    %v181 = vrot.slane %v180, 4
    %v182 = vadd.f32 %v180, %v181
    %v183 = vrot.slane %v182, 2
    %v184 = vadd.f32 %v182, %v183
    %v185 = vrot.slane %v184, 1
    %v186 = vadd.f32 %v184, %v185
    %v187 = vmul.f32 %v186, %v168
    %v188 = vld [vmem:[%s2] sm:$0x1]
    %v189 = vmul.f32 %v169, %v169
    %v190 = vsub.f32 %v187, %v189
    %v191 = vadd.f32 %v190, 1e-05
    %v192 = vrsqrt.pop %v191
    %v193 = vmul.f32 %v192, %v191
    %v194 = vmul.f32 %v193, %v192
    %v195 = vmul.f32 0.5, %v194
    %v196 = vsub.f32 1.5, %v195
    %v197 = vmul.f32 %v192, %v196
    %vm198 = vweird.f32 %v191
    %vm199 = vweird.f32 %v192
    %vm200 = vmor %vm198, %vm199
    %v201 = vsel %vm200, %v192, %v197
    %v202 = vmul.f32 %v188, %v201
    %v203 = vld [vmem:[%s3] sm:$0x1]
    %v204 = vmul.f32 %v169, %v202
    %v205 = vsub.f32 %v203, %v204
    %v207 = vperm.slane %v202, 0
    %v209 = vmul.f32 %v138, %v207
    %v210 = vmul.f32 %v141, %v207
    %v211 = vmul.f32 %v144, %v207
    %v212 = vmul.f32 %v147, %v207
    %v214 = vperm.slane %v205, 0
    %v216 = vadd.f32 %v209, %v214
    %v217 = vadd.f32 %v210, %v214
    %v218 = vadd.f32 %v211, %v214
    %v219 = vadd.f32 %v212, %v214
    %v220 = vmax.f32 %v216, 0.0
    %v221 = vmax.f32 %v217, 0.0
    %v222 = vmax.f32 %v218, 0.0
    %v223 = vmax.f32 %v219, 0.0
    %vm228 = vcmask 1040384
    %v229 = vrot.slane %v220, 7
    %v230 = vrot.slane %v221, 7
    %v231 = vsel %vm228, %v229, %v230
    %v232 = vrot.slane %v222, 7
    %v233 = vrot.slane %v223, 7
    %v234 = vsel %vm228, %v232, %v233
    %v241 = vsel %vm228, 0.0, %v229
    %v242 = vsel %vm228, 0.0, %v232
    %v243 = vsel %vm228, %v230, 0.0
    %v244 = vsel %vm228, %v233, 0.0
    %v249 = vrot.slane %v241, 1
    %v250 = vrot.slane %v231, 1
    %v251 = vsel %vm45, %v249, %v250
    %v252 = vrot.slane %v243, 1
    %v253 = vsel %vm45, %v250, %v252
    %v254 = vrot.slane %v242, 1
    %v255 = vrot.slane %v234, 1
    %v256 = vsel %vm45, %v254, %v255
    %v257 = vrot.slane %v244, 1
    %v258 = vsel %vm45, %v255, %v257
    %259 = vrot.lane.b32.xlu0 %v251, 8
    %v260 = vpop.permute.xlu0 %259
    %261 = vrot.lane.b32.xlu0 %v253, 8
    %v262 = vpop.permute.xlu0 %261
    %263 = vrot.lane.b32.xlu0 %v256, 8
    %v264 = vpop.permute.xlu0 %263
    %265 = vrot.lane.b32.xlu0 %v258, 8
    %v266 = vpop.permute.xlu0 %265
    %v271 = vrot.slane %v241, 2
    %v272 = vrot.slane %v231, 2
    %v273 = vsel %vm68, %v271, %v272
    %v274 = vrot.slane %v243, 2
    %v275 = vsel %vm68, %v272, %v274
    %v276 = vrot.slane %v242, 2
    %v277 = vrot.slane %v234, 2
    %v278 = vsel %vm68, %v276, %v277
    %v279 = vrot.slane %v244, 2
    %v280 = vsel %vm68, %v277, %v279
    %281 = vrot.lane.b32.xlu0 %v273, 16
    %v282 = vpop.permute.xlu0 %281
    %283 = vrot.lane.b32.xlu0 %v275, 16
    %v284 = vpop.permute.xlu0 %283
    %285 = vrot.lane.b32.xlu0 %v278, 16
    %v286 = vpop.permute.xlu0 %285
    %287 = vrot.lane.b32.xlu0 %v280, 16
    %v288 = vpop.permute.xlu0 %287
    %v293 = vsel %vm96, %v241, %v260
    %v294 = vsel %vm96, %v231, %v262
    %v295 = vsel %vm96, %v242, %v264
    %v296 = vsel %vm96, %v234, %v266
    %vm297 = vcmask 130048
    %v298 = vsel %vm297, %v293, %v282
    %v299 = vsel %vm297, %v294, %v284
    %v300 = vsel %vm297, %v295, %v286
    %v301 = vsel %vm297, %v296, %v288
    %v302 = vld [vmem:[%s4] sm:$0xff]
    %v303 = vld [vmem:[%s4 + $0x8] sm:$0xff]
    %v304 = vld [vmem:[%s4 + $0x10] sm:$0xff]
    %vm305 = vcmask 195584
    %v307 = vsel %vm305, %v298, 0
    %v310 = vsel %vm305, %v299, 0
    %v313 = vsel %vm305, %v300, 0
    %v316 = vsel %vm305, %v301, 0
    %318 = vmatpush.msra.mxu0 0.0
    %319 = vmatpush.msra.mxu0 0.0
    %320 = vmatpush.msra.mxu0 0.0
    %321 = vmatpush.msra.mxu0 0.0
    %322 = vmatpush.msra.mxu0 0.0
    %323 = vmatpush.msra.mxu0 0.0
    %324 = vmatpush.msra.mxu0 0.0
    %325 = vmatpush.msra.mxu0 0.0
    %326 = vmatpush.msra.mxu0 0.0
    %327 = vmatpush.msra.mxu0 0.0
    %328 = vmatpush.msra.mxu0 0.0
    %329 = vmatpush.msra.mxu0 0.0
    %330 = vmatpush.msra.mxu0 0.0
    %331 = vmatpush.msra.mxu0 %v304
    %332 = vmatpush.msra.mxu0 %v303
    %333 = vmatpush.msra.mxu0 %v302
    %334 = vmatmul.f32.gmra.mxu0 %v307
    %v335 = vpop.f32.mrf.mxu0
    %v336 = vadd.f32 0.0, %v335
    %337 = vmatmul.f32.gmra.mxu0 %v310
    %v338 = vpop.f32.mrf.mxu0
    %v339 = vadd.f32 0.0, %v338
    %340 = vmatmul.f32.gmra.mxu0 %v313
    %v341 = vpop.f32.mrf.mxu0
    %v342 = vadd.f32 0.0, %v341
    %343 = vmatmul.f32.gmra.mxu0 %v316
    %v344 = vpop.f32.mrf.mxu0
    %v345 = vadd.f32 0.0, %v344
    %346 = vdwg.mxu0
    %v347 = vsel %vm96, %v336, 0.0
    %v348 = vsel %vm96, %v339, 0.0
    %v349 = vadd.f32 %v347, %v348
    %v350 = vsel %vm96, %v342, 0.0
    %v351 = vadd.f32 %v349, %v350
    %v352 = vsel %vm96, %v345, 0.0
    %v353 = vadd.f32 %v351, %v352
    %v354 = vrot.slane %v353, 4
    %v355 = vadd.f32 %v353, %v354
    %v356 = vrot.slane %v355, 2
    %v357 = vadd.f32 %v355, %v356
    %v358 = vrot.slane %v357, 1
    %v359 = vadd.f32 %v357, %v358
    %v360 = vmul.f32 %v359, %v168
    %v361 = vmul.f32 %v336, %v336
    %v362 = vmul.f32 %v339, %v339
    %v363 = vmul.f32 %v342, %v342
    %v364 = vmul.f32 %v345, %v345
    %v365 = vsel %vm96, %v361, 0.0
    %v366 = vsel %vm96, %v362, 0.0
    %v367 = vadd.f32 %v365, %v366
    %v368 = vsel %vm96, %v363, 0.0
    %v369 = vadd.f32 %v367, %v368
    %v370 = vsel %vm96, %v364, 0.0
    %v371 = vadd.f32 %v369, %v370
    %v372 = vrot.slane %v371, 4
    %v373 = vadd.f32 %v371, %v372
    %v374 = vrot.slane %v373, 2
    %v375 = vadd.f32 %v373, %v374
    %v376 = vrot.slane %v375, 1
    %v377 = vadd.f32 %v375, %v376
    %v378 = vmul.f32 %v377, %v168
    %v379 = vld [vmem:[%s5] sm:$0x1]
    %v380 = vmul.f32 %v360, %v360
    %v381 = vsub.f32 %v378, %v380
    %v382 = vadd.f32 %v381, 1e-05
    %v383 = vrsqrt.pop %v382
    %v384 = vmul.f32 %v383, %v382
    %v385 = vmul.f32 %v384, %v383
    %v386 = vmul.f32 0.5, %v385
    %v387 = vsub.f32 1.5, %v386
    %v388 = vmul.f32 %v383, %v387
    %vm389 = vweird.f32 %v382
    %vm390 = vweird.f32 %v383
    %vm391 = vmor %vm389, %vm390
    %v392 = vsel %vm391, %v383, %v388
    %v393 = vmul.f32 %v379, %v392
    %v394 = vld [vmem:[%s6] sm:$0x1]
    %v395 = vmul.f32 %v360, %v393
    %v396 = vsub.f32 %v394, %v395
    %v398 = vperm.slane %v393, 0
    %v400 = vmul.f32 %v336, %v398
    %v401 = vmul.f32 %v339, %v398
    %v402 = vmul.f32 %v342, %v398
    %v403 = vmul.f32 %v345, %v398
    %v405 = vperm.slane %v396, 0
    %v407 = vadd.f32 %v400, %v405
    %v408 = vadd.f32 %v401, %v405
    %v409 = vadd.f32 %v402, %v405
    %v410 = vadd.f32 %v403, %v405
    %v411 = vld [vmem:[%s7] sm:$0xff]
    %v412 = vld [vmem:[%s7 + $0x8] sm:$0xf]
    %v413 = vld [vmem:[%s8] sm:$0x1]
    %v415 = vperm.slane %v413, 0
    %v418 = vsel %vm116, %v412, 0
    %420 = vmatpush.msra.mxu0 0.0
    %421 = vmatpush.msra.mxu0 0.0
    %422 = vmatpush.msra.mxu0 0.0
    %423 = vmatpush.msra.mxu0 0.0
    %424 = vmatpush.msra.mxu0 0.0
    %425 = vmatpush.msra.mxu0 0.0
    %426 = vmatpush.msra.mxu0 0.0
    %427 = vmatpush.msra.mxu0 0.0
    %428 = vmatpush.msra.mxu0 0.0
    %429 = vmatpush.msra.mxu0 0.0
    %430 = vmatpush.msra.mxu0 0.0
    %431 = vmatpush.msra.mxu0 0.0
    %432 = vmatpush.msra.mxu0 0.0
    %433 = vmatpush.msra.mxu0 0.0
    %434 = vmatpush.msra.mxu0 %v418
    %435 = vmatpush.msra.mxu0 %v411
    %436 = vmatmul.f32.gmra.mxu0 %v105
    %v437 = vpop.f32.mrf.mxu0
    %v438 = vadd.f32 %v415, %v437
    %439 = vmatmul.f32.gmra.mxu0 %v108
    %v440 = vpop.f32.mrf.mxu0
    %v441 = vadd.f32 %v415, %v440
    %442 = vmatmul.f32.gmra.mxu0 %v111
    %v443 = vpop.f32.mrf.mxu0
    %v444 = vadd.f32 %v415, %v443
    %445 = vmatmul.f32.gmra.mxu0 %v114
    %v446 = vpop.f32.mrf.mxu0
    %v447 = vadd.f32 %v415, %v446
    %448 = vdwg.mxu0
    %v453 = vrot.slane %v407, 2
    %v454 = vrot.slane %v407, 4
    %v455 = vrot.slane %v407, 6
    %v456 = vrot.slane %v408, 2
    %v457 = vrot.slane %v408, 4
    %v458 = vrot.slane %v408, 6
    %v459 = vrot.slane %v409, 2
    %v460 = vrot.slane %v409, 4
    %v461 = vrot.slane %v409, 6
    %v462 = vrot.slane %v410, 2
    %v463 = vrot.slane %v410, 4
    %v464 = vrot.slane %v410, 6
    %vm477 = vcmask 58368
    %v478 = vsel %vm477, %v407, -inf
    %v479 = vrot.slane %v478, 4
    %v480 = vmax.f32 %v478, %v479
    %v481 = vrot.slane %v480, 2
    %v482 = vmax.f32 %v480, %v481
    %v483 = vrot.slane %v482, 1
    %v484 = vmax.f32 %v482, %v483
    %v485 = vsel %vm477, %v453, -inf
    %v486 = vrot.slane %v485, 4
    %v487 = vmax.f32 %v485, %v486
    %v488 = vrot.slane %v487, 2
    %v489 = vmax.f32 %v487, %v488
    %v490 = vrot.slane %v489, 1
    %v491 = vmax.f32 %v489, %v490
    %v492 = vsel %vm477, %v454, -inf
    %v493 = vrot.slane %v492, 4
    %v494 = vmax.f32 %v492, %v493
    %v495 = vrot.slane %v494, 2
    %v496 = vmax.f32 %v494, %v495
    %v497 = vrot.slane %v496, 1
    %v498 = vmax.f32 %v496, %v497
    %v499 = vsel %vm477, %v455, -inf
    %v500 = vrot.slane %v499, 4
    %v501 = vmax.f32 %v499, %v500
    %v502 = vrot.slane %v501, 2
    %v503 = vmax.f32 %v501, %v502
    %v504 = vrot.slane %v503, 1
    %v505 = vmax.f32 %v503, %v504
    %v506 = vsel %vm477, %v408, -inf
    %v507 = vrot.slane %v506, 4
    %v508 = vmax.f32 %v506, %v507
    %v509 = vrot.slane %v508, 2
    %v510 = vmax.f32 %v508, %v509
    %v511 = vrot.slane %v510, 1
    %v512 = vmax.f32 %v510, %v511
    %v513 = vsel %vm477, %v456, -inf
    %v514 = vrot.slane %v513, 4
    %v515 = vmax.f32 %v513, %v514
    %v516 = vrot.slane %v515, 2
    %v517 = vmax.f32 %v515, %v516
    %v518 = vrot.slane %v517, 1
    %v519 = vmax.f32 %v517, %v518
    %v520 = vsel %vm477, %v457, -inf
    %v521 = vrot.slane %v520, 4
    %v522 = vmax.f32 %v520, %v521
    %v523 = vrot.slane %v522, 2
    %v524 = vmax.f32 %v522, %v523
    %v525 = vrot.slane %v524, 1
    %v526 = vmax.f32 %v524, %v525
    %v527 = vsel %vm477, %v458, -inf
    %v528 = vrot.slane %v527, 4
    %v529 = vmax.f32 %v527, %v528
    %v530 = vrot.slane %v529, 2
    %v531 = vmax.f32 %v529, %v530
    %v532 = vrot.slane %v531, 1
    %v533 = vmax.f32 %v531, %v532
    %v534 = vsel %vm477, %v409, -inf
    %v535 = vrot.slane %v534, 4
    %v536 = vmax.f32 %v534, %v535
    %v537 = vrot.slane %v536, 2
    %v538 = vmax.f32 %v536, %v537
    %v539 = vrot.slane %v538, 1
    %v540 = vmax.f32 %v538, %v539
    %v541 = vsel %vm477, %v459, -inf
    %v542 = vrot.slane %v541, 4
    %v543 = vmax.f32 %v541, %v542
    %v544 = vrot.slane %v543, 2
    %v545 = vmax.f32 %v543, %v544
    %v546 = vrot.slane %v545, 1
    %v547 = vmax.f32 %v545, %v546
    %v548 = vsel %vm477, %v460, -inf
    %v549 = vrot.slane %v548, 4
    %v550 = vmax.f32 %v548, %v549
    %v551 = vrot.slane %v550, 2
    %v552 = vmax.f32 %v550, %v551
    %v553 = vrot.slane %v552, 1
    %v554 = vmax.f32 %v552, %v553
    %v555 = vsel %vm477, %v461, -inf
    %v556 = vrot.slane %v555, 4
    %v557 = vmax.f32 %v555, %v556
    %v558 = vrot.slane %v557, 2
    %v559 = vmax.f32 %v557, %v558
    %v560 = vrot.slane %v559, 1
    %v561 = vmax.f32 %v559, %v560
    %v562 = vsel %vm477, %v410, -inf
    %v563 = vrot.slane %v562, 4
    %v564 = vmax.f32 %v562, %v563
    %v565 = vrot.slane %v564, 2
    %v566 = vmax.f32 %v564, %v565
    %v567 = vrot.slane %v566, 1
    %v568 = vmax.f32 %v566, %v567
    %v569 = vsel %vm477, %v462, -inf
    %v570 = vrot.slane %v569, 4
    %v571 = vmax.f32 %v569, %v570
    %v572 = vrot.slane %v571, 2
    %v573 = vmax.f32 %v571, %v572
    %v574 = vrot.slane %v573, 1
    %v575 = vmax.f32 %v573, %v574
    %v576 = vsel %vm477, %v463, -inf
    %v577 = vrot.slane %v576, 4
    %v578 = vmax.f32 %v576, %v577
    %v579 = vrot.slane %v578, 2
    %v580 = vmax.f32 %v578, %v579
    %v581 = vrot.slane %v580, 1
    %v582 = vmax.f32 %v580, %v581
    %v583 = vsel %vm477, %v464, -inf
    %v584 = vrot.slane %v583, 4
    %v585 = vmax.f32 %v583, %v584
    %v586 = vrot.slane %v585, 2
    %v587 = vmax.f32 %v585, %v586
    %v588 = vrot.slane %v587, 1
    %v589 = vmax.f32 %v587, %v588
    %v594 = vrot.slane %v438, 2
    %v595 = vrot.slane %v438, 4
    %v596 = vrot.slane %v438, 6
    %v597 = vrot.slane %v441, 2
    %v598 = vrot.slane %v441, 4
    %v599 = vrot.slane %v441, 6
    %v600 = vrot.slane %v444, 2
    %v601 = vrot.slane %v444, 4
    %v602 = vrot.slane %v444, 6
    %v603 = vrot.slane %v447, 2
    %v604 = vrot.slane %v447, 4
    %v605 = vrot.slane %v447, 6
    %v618 = vsel %vm477, %v438, -inf
    %v619 = vrot.slane %v618, 4
    %v620 = vmax.f32 %v618, %v619
    %v621 = vrot.slane %v620, 2
    %v622 = vmax.f32 %v620, %v621
    %v623 = vrot.slane %v622, 1
    %v624 = vmax.f32 %v622, %v623
    %v625 = vsel %vm477, %v594, -inf
    %v626 = vrot.slane %v625, 4
    %v627 = vmax.f32 %v625, %v626
    %v628 = vrot.slane %v627, 2
    %v629 = vmax.f32 %v627, %v628
    %v630 = vrot.slane %v629, 1
    %v631 = vmax.f32 %v629, %v630
    %v632 = vsel %vm477, %v595, -inf
    %v633 = vrot.slane %v632, 4
    %v634 = vmax.f32 %v632, %v633
    %v635 = vrot.slane %v634, 2
    %v636 = vmax.f32 %v634, %v635
    %v637 = vrot.slane %v636, 1
    %v638 = vmax.f32 %v636, %v637
    %v639 = vsel %vm477, %v596, -inf
    %v640 = vrot.slane %v639, 4
    %v641 = vmax.f32 %v639, %v640
    %v642 = vrot.slane %v641, 2
    %v643 = vmax.f32 %v641, %v642
    %v644 = vrot.slane %v643, 1
    %v645 = vmax.f32 %v643, %v644
    %v646 = vsel %vm477, %v441, -inf
    %v647 = vrot.slane %v646, 4
    %v648 = vmax.f32 %v646, %v647
    %v649 = vrot.slane %v648, 2
    %v650 = vmax.f32 %v648, %v649
    %v651 = vrot.slane %v650, 1
    %v652 = vmax.f32 %v650, %v651
    %v653 = vsel %vm477, %v597, -inf
    %v654 = vrot.slane %v653, 4
    %v655 = vmax.f32 %v653, %v654
    %v656 = vrot.slane %v655, 2
    %v657 = vmax.f32 %v655, %v656
    %v658 = vrot.slane %v657, 1
    %v659 = vmax.f32 %v657, %v658
    %v660 = vsel %vm477, %v598, -inf
    %v661 = vrot.slane %v660, 4
    %v662 = vmax.f32 %v660, %v661
    %v663 = vrot.slane %v662, 2
    %v664 = vmax.f32 %v662, %v663
    %v665 = vrot.slane %v664, 1
    %v666 = vmax.f32 %v664, %v665
    %v667 = vsel %vm477, %v599, -inf
    %v668 = vrot.slane %v667, 4
    %v669 = vmax.f32 %v667, %v668
    %v670 = vrot.slane %v669, 2
    %v671 = vmax.f32 %v669, %v670
    %v672 = vrot.slane %v671, 1
    %v673 = vmax.f32 %v671, %v672
    %v674 = vsel %vm477, %v444, -inf
    %v675 = vrot.slane %v674, 4
    %v676 = vmax.f32 %v674, %v675
    %v677 = vrot.slane %v676, 2
    %v678 = vmax.f32 %v676, %v677
    %v679 = vrot.slane %v678, 1
    %v680 = vmax.f32 %v678, %v679
    %v681 = vsel %vm477, %v600, -inf
    %v682 = vrot.slane %v681, 4
    %v683 = vmax.f32 %v681, %v682
    %v684 = vrot.slane %v683, 2
    %v685 = vmax.f32 %v683, %v684
    %v686 = vrot.slane %v685, 1
    %v687 = vmax.f32 %v685, %v686
    %v688 = vsel %vm477, %v601, -inf
    %v689 = vrot.slane %v688, 4
    %v690 = vmax.f32 %v688, %v689
    %v691 = vrot.slane %v690, 2
    %v692 = vmax.f32 %v690, %v691
    %v693 = vrot.slane %v692, 1
    %v694 = vmax.f32 %v692, %v693
    %v695 = vsel %vm477, %v602, -inf
    %v696 = vrot.slane %v695, 4
    %v697 = vmax.f32 %v695, %v696
    %v698 = vrot.slane %v697, 2
    %v699 = vmax.f32 %v697, %v698
    %v700 = vrot.slane %v699, 1
    %v701 = vmax.f32 %v699, %v700
    %v702 = vsel %vm477, %v447, -inf
    %v703 = vrot.slane %v702, 4
    %v704 = vmax.f32 %v702, %v703
    %v705 = vrot.slane %v704, 2
    %v706 = vmax.f32 %v704, %v705
    %v707 = vrot.slane %v706, 1
    %v708 = vmax.f32 %v706, %v707
    %v709 = vsel %vm477, %v603, -inf
    %v710 = vrot.slane %v709, 4
    %v711 = vmax.f32 %v709, %v710
    %v712 = vrot.slane %v711, 2
    %v713 = vmax.f32 %v711, %v712
    %v714 = vrot.slane %v713, 1
    %v715 = vmax.f32 %v713, %v714
    %v716 = vsel %vm477, %v604, -inf
    %v717 = vrot.slane %v716, 4
    %v718 = vmax.f32 %v716, %v717
    %v719 = vrot.slane %v718, 2
    %v720 = vmax.f32 %v718, %v719
    %v721 = vrot.slane %v720, 1
    %v722 = vmax.f32 %v720, %v721
    %v723 = vsel %vm477, %v605, -inf
    %v724 = vrot.slane %v723, 4
    %v725 = vmax.f32 %v723, %v724
    %v726 = vrot.slane %v725, 2
    %v727 = vmax.f32 %v725, %v726
    %v728 = vrot.slane %v727, 1
    %v729 = vmax.f32 %v727, %v728
    %v730 = vadd.f32 %v484, %v624
    %v731 = vadd.f32 %v491, %v631
    %v732 = vadd.f32 %v498, %v638
    %v733 = vadd.f32 %v505, %v645
    %v734 = vadd.f32 %v512, %v652
    %v735 = vadd.f32 %v519, %v659
    %v736 = vadd.f32 %v526, %v666
    %v737 = vadd.f32 %v533, %v673
    %v738 = vadd.f32 %v540, %v680
    %v739 = vadd.f32 %v547, %v687
    %v740 = vadd.f32 %v554, %v694
    %v741 = vadd.f32 %v561, %v701
    %v742 = vadd.f32 %v568, %v708
    %v743 = vadd.f32 %v575, %v715
    %v744 = vadd.f32 %v582, %v722
    %v745 = vadd.f32 %v589, %v729
    %v746 = vmax.f32 %v730, 0.0
    %v747 = vmax.f32 %v731, 0.0
    %v748 = vmax.f32 %v732, 0.0
    %v749 = vmax.f32 %v733, 0.0
    %v750 = vmax.f32 %v734, 0.0
    %v751 = vmax.f32 %v735, 0.0
    %v752 = vmax.f32 %v736, 0.0
    %v753 = vmax.f32 %v737, 0.0
    %v754 = vmax.f32 %v738, 0.0
    %v755 = vmax.f32 %v739, 0.0
    %v756 = vmax.f32 %v740, 0.0
    %v757 = vmax.f32 %v741, 0.0
    %v758 = vmax.f32 %v742, 0.0
    %v759 = vmax.f32 %v743, 0.0
    %v760 = vmax.f32 %v744, 0.0
    %v761 = vmax.f32 %v745, 0.0
    %vm778 = vcmask 1041409
    %v779 = vsel %vm778, %v747, %v746
    %vm780 = vcmask 1042434
    %v781 = vsel %vm780, %v748, %v779
    %vm782 = vcmask 1043459
    %v783 = vsel %vm782, %v749, %v781
    %vm784 = vcmask 1044484
    %v785 = vsel %vm784, %v750, %v783
    %vm786 = vcmask 1045509
    %v787 = vsel %vm786, %v751, %v785
    %vm788 = vcmask 1046534
    %v789 = vsel %vm788, %v752, %v787
    %vm790 = vcmask 1047559
    %v791 = vsel %vm790, %v753, %v789
    %v792 = vsel %vm778, %v755, %v754
    %v793 = vsel %vm780, %v756, %v792
    %v794 = vsel %vm782, %v757, %v793
    %v795 = vsel %vm784, %v758, %v794
    %v796 = vsel %vm786, %v759, %v795
    %v797 = vsel %vm788, %v760, %v796
    %v798 = vsel %vm790, %v761, %v797
    %801 = vst.msk [vmem:[#allocation2] sm:$0xff] %vm96, %v791
    %802 = vst.msk [vmem:[#allocation2 + $0x8] sm:$0xff] %vm96, %v798
    // Predicated region
    $region38: #{tpu_custom_call.1} parent=1 // pred_check
      _
    $region39: #{tpu_custom_call.1} parent=1 // pred_check_branch
      %804 = sbr.rel (0) target = $region41
    $region40: #{tpu_custom_call.1} parent=1 // pred_region
      %806 = vsyncadd [#allocation3], 0
      %s807 = sshll.u32 [#allocation2], 4
      %s808 = int_to_ptr.vmem [resolvable:$true] %s807
      %s809 = sshll.u32 %s9, 4
      %s810 = int_to_ptr.hbm [resolvable:$true] %s809
      %815 = dma.vmem_to_hbm [thread:$0]  %s808, 256, %s810, [#allocation3], 128, 128, 8
    $region41: #{tpu_custom_call.1} parent=1 // pred_fallthru
      _
    // Predicated region
    $region42: #{tpu_custom_call.1} parent=1 // pred_check
      _
    $region43: #{tpu_custom_call.1} parent=1 // pred_check_branch
      %817 = sbr.rel (0) target = $region45
    $region44: #{tpu_custom_call.1} parent=1 // pred_region
      %819 = dma.done [#allocation3], 256
    $region45: #{tpu_custom_call.1} parent=1 // pred_fallthru
      _
    %820 = vsyncpa [#allocation3], 1

</llo_original>
